<compile_context>
chip_gen: v7x
topology: tpu7x:2x2x1
jax: 0.10.0
libtpu: 0.0.40
codegen_flags: <defaults>
</compile_context>

<pallas_src>
import itertools
import math

import numpy as np
import jax
import jax.numpy as jnp
from jax.experimental import pallas as pl
from jax.experimental.pallas import tpu as pltpu

_HIGHEST = jax.lax.Precision.HIGHEST
_VMEM_LIMIT = 48 * 1024 * 1024        # < v7x's 64 MiB physical VMEM

# ----------------------------------------------------------------------------
# Deterministic parameter initialization (matches the module's __init__ values)
# ----------------------------------------------------------------------------
Y_TABLE = np.array(
    [[16, 11, 10, 16, 24, 40, 51, 61],
     [12, 12, 14, 19, 26, 58, 60, 55],
     [14, 13, 16, 24, 40, 57, 69, 56],
     [14, 17, 22, 29, 51, 87, 80, 62],
     [18, 22, 37, 56, 68, 109, 103, 77],
     [24, 35, 55, 64, 81, 104, 113, 92],
     [49, 64, 78, 87, 103, 121, 120, 101],
     [72, 92, 95, 98, 112, 100, 103, 99]], dtype=np.float32).T

C_TABLE = np.full((8, 8), 99, dtype=np.float32)
C_TABLE[:4, :4] = np.array([[17, 18, 24, 47], [18, 21, 26, 66],
                            [24, 26, 56, 99], [47, 66, 99, 99]],
                           dtype=np.float32).T

_alpha_1d = np.array([1.0 / np.sqrt(2)] + [1.0] * 7, dtype=np.float64)
ALPHA = np.outer(_alpha_1d, _alpha_1d).astype(np.float32)           # (8, 8)

_IDCT_TENSOR = np.zeros((8, 8, 8, 8), dtype=np.float32)
for _x, _y, _u, _v in itertools.product(range(8), repeat=4):
    _IDCT_TENSOR[_x, _y, _u, _v] = (math.cos((2 * _u + 1) * _x * math.pi / 16) *
                                    math.cos((2 * _v + 1) * _y * math.pi / 16))
IDCT_MAT = _IDCT_TENSOR.reshape(64, 64)                             # contract (x,y) -> (u,v)

RGB_SHIFT = np.array([0.0, -128.0, -128.0], dtype=np.float32)
RGB_MATRIX = np.array([[1.0, 0.0, 1.402],
                       [1.0, -0.344136, -0.714136],
                       [1.0, 1.772, 0.0]], dtype=np.float32).T      # matches YCbCr2RGBJpeg


# ----------------------------------------------------------------------------
# Kernel 1: dequantize + iDCT8x8 (+ optional 2x column upsample for chroma),
#           everything folded into one (64P, out_cols*P) matmul per row tile.
#           Handles 1..n same-shaped coefficient planes in a single launch.
# ----------------------------------------------------------------------------
def _make_dequant_idct_kernel(n_planes):
    def kernel(*refs):
        # refs = (coef_0 .. coef_{n-1}, mat, out_0 .. out_{n-1})
        mat = refs[n_planes][...]
        for i in range(n_planes):
            refs[n_planes + 1 + i][...] = (
                jnp.dot(refs[i][...], mat,
                        preferred_element_type=jnp.float32,
                        precision=_HIGHEST) + 128.0)
    return kernel


def _folded_matrix(table, factor, upsample_cols):
    """dequant table * factor * iDCT alpha * 0.25 folded into the iDCT matrix.
    When upsample_cols is True the output columns are additionally duplicated,
    i.e. each 8x8 block is emitted as an 8x16 (column-upsampled) spatial block."""
    scale = (jnp.asarray(table) * jnp.asarray(factor, jnp.float32) *
             jnp.asarray(ALPHA)).reshape(64, 1)
    m = 0.25 * scale * jnp.asarray(IDCT_MAT)          # (64, 64), out col = x*8 + y
    if upsample_cols:
        m = jnp.repeat(m.reshape(64, 8, 8), 2, axis=2).reshape(64, 128)
        # out col = x*16 + 2*y + dy  -> free reshape to (.., 8, 16) blocks
    return m


def dequant_idct(coeff_list, table, factor, *, upsample_cols=False, row_tile=2048):
    """coeff_list: list of (B, N, 8, 8) planes sharing one quantization table.
    Returns a list of spatial blocks, each (B, N, 8, 8) (or (B, N, 8, 16) when
    upsample_cols=True, i.e. chroma blocks already 2x-upsampled along width)."""
    B, N = coeff_list[0].shape[0], coeff_list[0].shape[1]
    rows = B * N
    pack = 2 if rows % 2 == 0 else 1        # lane-dense: 2 blocks/row -> 128 lanes
    rows_p = rows // pack
    in_lanes = 64 * pack
    out_cols = 128 if upsample_cols else 64
    out_lanes = out_cols * pack

    m = _folded_matrix(table, factor, upsample_cols)        # (64, out_cols)
    mat = m if pack == 1 else jnp.kron(jnp.eye(pack, dtype=jnp.float32), m)

    # free reshapes (no HBM pass): (B, N, 8, 8) -> (rows_p, 64*pack)
    flats = [c.astype(jnp.float32).reshape(rows_p, in_lanes) for c in coeff_list]

    tile = min(rows_p, row_tile)            # big tiles; ragged last block is row-local
    in_spec = pl.BlockSpec((tile, in_lanes), lambda i: (i, 0))
    mat_spec = pl.BlockSpec((in_lanes, out_lanes), lambda i: (0, 0))
    out_spec = pl.BlockSpec((tile, out_lanes), lambda i: (i, 0))

    outs = pl.pallas_call(
        _make_dequant_idct_kernel(len(flats)),
        out_shape=[jax.ShapeDtypeStruct((rows_p, out_lanes), jnp.float32)
                   for _ in flats],
        grid=(pl.cdiv(rows_p, tile),),
        in_specs=[in_spec] * len(flats) + [mat_spec],
        out_specs=[out_spec] * len(flats),
        compiler_params=pltpu.CompilerParams(
            dimension_semantics=("parallel",),
            vmem_limit_bytes=_VMEM_LIMIT),
    )(*flats, mat)

    if not isinstance(outs, (list, tuple)):
        outs = [outs]
    blk_w = 16 if upsample_cols else 8
    return [o.reshape(B, N, 8, blk_w) for o in outs]


# ----------------------------------------------------------------------------
# Kernel 2: fused 2x chroma ROW upsample (tiny 0/1 matmul) + YCbCr->RGB +
#           clamp + /255, tiled over (batch, H).  Chroma arrives already
#           column-upsampled at (H/2, W), so no O(W) work and no (W/2,W) matrix.
# ----------------------------------------------------------------------------
def _color_kernel(y_ref, cb_ref, cr_ref, up_ref, out_ref):
    y = y_ref[...]                                    # (TH, W)
    up = up_ref[...]                                  # (TH, TH//2), 0/1 row duplicator

    cb = jnp.dot(up, cb_ref[...], preferred_element_type=jnp.float32,
                 precision=_HIGHEST) - 128.0          # (TH, W)
    cr = jnp.dot(up, cr_ref[...], preferred_element_type=jnp.float32,
                 precision=_HIGHEST) - 128.0          # (TH, W)

    inv255 = 1.0 / 255.0
    # fused per-channel expressions (coefficients == YCbCr2RGBJpeg matrix rows)
    out_ref[0, :, :] = jnp.clip(y + 1.402 * cr, 0.0, 255.0) * inv255
    out_ref[1, :, :] = jnp.clip(y - 0.344136 * cb - 0.714136 * cr,
                                0.0, 255.0) * inv255
    out_ref[2, :, :] = jnp.clip(y + 1.772 * cb, 0.0, 255.0) * inv255


def _pick_row_tile(h, target=128):
    """Largest multiple-of-16 divisor of h that is <= target (h itself if small).
    Divisor-based (no ragged stripes): the chroma-row contraction must never see
    uninitialized VMEM rows.  TODO(synk): switch to fixed 128 + ragged last stripe
    once Pallas TPU's clamp-vs-mask semantics for ragged blocks is pinned down."""
    if h <= target:
        return h
    for d in range(target, 15, -16):
        if h % d == 0:
            return d
    return 16


def color_convert(y_img, cb_img, cr_img):
    """y: (B,H,W); cb/cr column-upsampled chroma at (B,H/2,W) -> (B,3,H,W) in [0,1]."""
    B, H, W = y_img.shape
    TH = _pick_row_tile(H)

    up = np.zeros((TH, TH // 2), np.float32)          # row duplicator: out[i]=in[i//2]
    up[np.arange(TH), np.arange(TH) // 2] = 1.0

    return pl.pallas_call(
        _color_kernel,
        out_shape=jax.ShapeDtypeStruct((B, 3, H, W), jnp.float32),
        grid=(B, H // TH),
        in_specs=[
            pl.BlockSpec((None, TH, W), lambda b, t: (b, t, 0)),
            pl.BlockSpec((None, TH // 2, W), lambda b, t: (b, t, 0)),
            pl.BlockSpec((None, TH // 2, W), lambda b, t: (b, t, 0)),
            pl.BlockSpec((TH, TH // 2), lambda b, t: (0, 0)),
        ],
        out_specs=pl.BlockSpec((None, 3, TH, W), lambda b, t: (b, 0, t, 0)),
        compiler_params=pltpu.CompilerParams(
            dimension_semantics=("parallel", "parallel"),
            vmem_limit_bytes=_VMEM_LIMIT),
    )(y_img.astype(jnp.float32), cb_img.astype(jnp.float32),
      cr_img.astype(jnp.float32), jnp.asarray(up))


# ----------------------------------------------------------------------------
# JAX glue: block merging (single XLA transpose pass per plane)
# ----------------------------------------------------------------------------
def block_merge(patches, h, w, blk_h=8, blk_w=8):
    """(B, h/blk_h * w/blk_w, blk_h, blk_w) -> (B, h, w); generalizes BlockMerging."""
    B = patches.shape[0]
    x = patches.reshape(B, h // blk_h, w // blk_w, blk_h, blk_w)
    x = jnp.transpose(x, (0, 1, 3, 2, 4))
    return x.reshape(B, h, w)


def decompress_jpeg(y, cb, cr, imgh, imgw, factor=1.0):
    assert imgh % 16 == 0 and imgw % 16 == 0, (
        "DeCompressJpeg (as specified) requires imgh/imgw to be multiples of 16")

    (y_blk,) = dequant_idct([y], Y_TABLE, factor)
    # Cb + Cr in ONE launch; their 2x column upsample is folded into the matrix.
    cb_blk, cr_blk = dequant_idct([cb, cr], C_TABLE, factor, upsample_cols=True)

    y_img = block_merge(y_blk, imgh, imgw)                       # (B, H, W)
    cb_img = block_merge(cb_blk, imgh // 2, imgw, 8, 16)         # (B, H/2, W)
    cr_img = block_merge(cr_blk, imgh // 2, imgw, 8, 16)         # (B, H/2, W)

    # chroma 2x row upsample is fused into the color kernel
    return color_convert(y_img, cb_img, cr_img)                  # (B, 3, imgh, imgw)


# ----------------------------------------------------------------------------
# Pure-JAX reference (mirrors the PyTorch forward exactly) for verification
# ----------------------------------------------------------------------------
def _upsample2x_ref(x):
    return jnp.repeat(jnp.repeat(x, 2, axis=1), 2, axis=2)


def reference(y, cb, cr, imgh, imgw, factor=1.0):
    idct_t = jnp.asarray(_IDCT_TENSOR)
    alpha = jnp.asarray(ALPHA)

    def process(comp, table, h, w):
        deq = comp * (jnp.asarray(table) * factor)
        im = deq * alpha
        res = 0.25 * jnp.tensordot(im, idct_t, axes=2,
                                   precision=_HIGHEST) + 128.0
        return block_merge(res, h, w)

    yi = process(y, Y_TABLE, imgh, imgw)
    cbi = process(cb, C_TABLE, imgh // 2, imgw // 2)
    cri = process(cr, C_TABLE, imgh // 2, imgw // 2)
    img = jnp.stack([yi, _upsample2x_ref(cbi), _upsample2x_ref(cri)], axis=-1)
    res = jnp.tensordot(img + jnp.asarray(RGB_SHIFT), jnp.asarray(RGB_MATRIX),
                        axes=1, precision=_HIGHEST)
    res = jnp.transpose(res, (0, 3, 1, 2))
    res = jnp.clip(res, 0.0, 255.0)
    return res / 255.0


if __name__ == "__main__":
    key = jax.random.PRNGKey(0)

    def run_case(case_key, batch, imgh, imgw):
        k1, k2, k3 = jax.random.split(case_key, 3)
        n_y = (imgh * imgw) // 64
        n_c = ((imgh // 2) * (imgw // 2)) // 64
        # synthetic quantized DCT coefficients (small integers, like real JPEG data)
        y = jnp.round(jax.random.normal(k1, (batch, n_y, 8, 8), jnp.float32) * 3.0)
        cb = jnp.round(jax.random.normal(k2, (batch, n_c, 8, 8), jnp.float32) * 3.0)
        cr = jnp.round(jax.random.normal(k3, (batch, n_c, 8, 8), jnp.float32) * 3.0)

        out = jax.block_until_ready(decompress_jpeg(y, cb, cr, imgh, imgw, 1.0))
        ref = jax.block_until_ready(reference(y, cb, cr, imgh, imgw, 1.0))

        assert out.shape == (batch, 3, imgh, imgw), out.shape
        np.testing.assert_allclose(np.asarray(out), np.asarray(ref),
                                   rtol=1e-4, atol=1e-4)

    k_a, k_b = jax.random.split(key)
    run_case(k_a, 2, 16, 16)    # main shape (2-block-packed / 128-lane path)
    run_case(k_b, 1, 16, 16)    # exercises the odd-row (pack=1) chroma path
    print("KERNEL_OK")
</pallas_src>

<mosaic_0001>
module attributes {stable_mosaic.version = 11 : i64} {
  func.func @kernel(%arg0: i32, %arg1: memref<4x128xf32, #tpu.memory_space<vmem>>, %arg2: memref<128x128xf32, #tpu.memory_space<vmem>>, %arg3: memref<4x128xf32, #tpu.memory_space<vmem>>) attributes {dimension_semantics = [#tpu.dimension_semantics<parallel>], iteration_bounds = array<i64: 1>, scalar_prefetch = 0 : i64, scratch_operands = 0 : i64, tpu.core_type = #tpu.core_type<tc>, window_params = [{transform_indices = @transform_0, window_bounds = array<i64: 4, 128>}, {pipeline_mode = #tpu.pipeline_mode<synchronous>, transform_indices = @transform_1, window_bounds = array<i64: 128, 128>}, {transform_indices = @transform_2, window_bounds = array<i64: 4, 128>}]} {
    %c0 = arith.constant 0 : index
    %c0_0 = arith.constant 0 : index
    %0 = vector.load %arg2[%c0, %c0_0] : memref<128x128xf32, #tpu.memory_space<vmem>>, vector<128x128xf32>
    %c0_1 = arith.constant 0 : index
    %c0_2 = arith.constant 0 : index
    %1 = vector.load %arg1[%c0_1, %c0_2] : memref<4x128xf32, #tpu.memory_space<vmem>>, vector<4x128xf32>
    %cst = arith.constant dense<0.000000e+00> : vector<4x128xf32>
    %2 = tpu.matmul %1, %0, %cst {dimension_numbers = #tpu.dot_dimension_numbers<[1], [0], [0], [1], [0, 0, 1, 1], [], []>, precision = #tpu.contract_precision<fp32>} : vector<4x128xf32>, vector<128x128xf32>, vector<4x128xf32> -> vector<4x128xf32>
    %cst_3 = arith.constant 1.280000e+02 : f32
    %3 = vector.broadcast %cst_3 : f32 to vector<4x128xf32>
    %4 = arith.addf %2, %3 : vector<4x128xf32>
    %c0_4 = arith.constant 0 : index
    %c0_5 = arith.constant 0 : index
    %5 = vector.load %arg3[%c0_4, %c0_5] : memref<4x128xf32, #tpu.memory_space<vmem>>, vector<4x128xf32>
    tpu.vector_store %arg3[%c0_4, %c0_5], %4 {strides = array<i32>} : memref<4x128xf32, #tpu.memory_space<vmem>>, vector<4x128xf32>,
    return
  }
  func.func @transform_0(%arg0: i32) -> (i32, i32) {
    %c0_i32 = arith.constant 0 : i32
    %c0_i32_0 = arith.constant 0 : i32
    return %arg0, %c0_i32 : i32, i32
  }
  func.func @transform_1(%arg0: i32) -> (i32, i32) {
    %c0_i32 = arith.constant 0 : i32
    %c0_i32_0 = arith.constant 0 : i32
    %c0_i32_1 = arith.constant 0 : i32
    return %c0_i32, %c0_i32_0 : i32, i32
  }
  func.func @transform_2(%arg0: i32) -> (i32, i32) {
    %c0_i32 = arith.constant 0 : i32
    %c0_i32_0 = arith.constant 0 : i32
    return %arg0, %c0_i32 : i32, i32
  }
}

</mosaic_0001>

<llo_original>
// kernel: tpu_custom_call.1
$region0: #{tpu_custom_call.1}
  #allocation0 [shape = 'u32[]', space=smem, size = 0x4, offset = 0x4, fixed_abs, tag = 'smem constant byte address 0x4 - core index']
  #allocation1 [shape = 'u32[144,128]{1,0:T(1,128)}', space=vmem, size = 0x12000, scoped, tag = 'internal scratch']
  %s0 = inlined_call_operand.hbm [shape: f32[4,128], index: 0, kind: input, shape index: {}]
  %s1 = inlined_call_operand.hbm [shape: f32[128,128], index: 1, kind: input, shape index: {}]
  %s2 = inlined_call_operand.hbm [shape: f32[4,128], index: 2, kind: output, shape index: {}]
  %s3 = sld [smem:[#allocation0]]
  $region26: #{tpu_custom_call.1} parent=0
    _
  %s5 = ssub.s32 1, %s3
  %s6 = scalar_select 0, %s5, %s3
  $region1: #{tpu_custom_call.1} parent=0
    #allocation2 [shape = 'u8[2048]{0}', space=vmem, size = 0x800, scoped, tag = 'input window, operand 0, single buffered']
    #allocation3 [shape = 's32[1]{0}', space=sflag, size = 0x4, scoped, tag = 'scoped memory for tpu_custom_call.1']
    #allocation4 [shape = 's32[1]{0}', space=sflag, size = 0x4, scoped, tag = 'scoped memory for tpu_custom_call.1']
    #allocation5 [shape = 'u8[65536]{0}', space=vmem, size = 0x10000, scoped, tag = 'input window, operand 1, single buffered']
    #allocation6 [shape = 's32[1]{0}', space=sflag, size = 0x4, scoped, tag = 'scoped memory for tpu_custom_call.1']
    #allocation7 [shape = 'u8[2048]{0}', space=vmem, size = 0x800, scoped, tag = 'output window, operand 0, single buffered']
    %7 = vsyncpa [#allocation3], 0
    %8 = vsyncpa [#allocation6], 0
    %9 = vsyncpa [#allocation4], 0
    // Predicated region
    $region2: #{tpu_custom_call.1} parent=1 // pred_check
      _
    $region3: #{tpu_custom_call.1} parent=1 // pred_check_branch
      %11 = sbr.rel (0) target = $region5
    $region4: #{tpu_custom_call.1} parent=1 // pred_region
      %s13 = ssub.s32 64, 64
      %14 = vsyncadd [#allocation3], %s13
      %s16 = sshll.u32 [#allocation2], 4
      %s17 = int_to_ptr.vmem [resolvable:$true] %s16
      %19 = dma.hbm_to_vmem [thread:$0]  %s0, 64, %s17, [#allocation3]
    $region5: #{tpu_custom_call.1} parent=1 // pred_fallthru
      _
    // Predicated region
    $region6: #{tpu_custom_call.1} parent=1 // pred_check
      _
    $region7: #{tpu_custom_call.1} parent=1 // pred_check_branch
      %21 = sbr.rel (0) target = $region9
    $region8: #{tpu_custom_call.1} parent=1 // pred_region
      %s23 = ssub.s32 2048, 2048
      %24 = vsyncadd [#allocation6], %s23
      %s25 = sshll.u32 [#allocation5], 4
      %s26 = int_to_ptr.vmem [resolvable:$true] %s25
      %31 = dma.hbm_to_vmem [thread:$0]  %s1, 2048, %s26, [#allocation6], 128, 128, 8
    $region9: #{tpu_custom_call.1} parent=1 // pred_fallthru
      _
    // Predicated region
    $region10: #{tpu_custom_call.1} parent=1 // pred_check
      _
    $region11: #{tpu_custom_call.1} parent=1 // pred_check_branch
      %33 = sbr.rel (0) target = $region13
    $region12: #{tpu_custom_call.1} parent=1 // pred_region
      %34 = dma.done [#allocation3], 64
    $region13: #{tpu_custom_call.1} parent=1 // pred_fallthru
      _
    // Predicated region
    $region14: #{tpu_custom_call.1} parent=1 // pred_check
      _
    $region15: #{tpu_custom_call.1} parent=1 // pred_check_branch
      %36 = sbr.rel (0) target = $region17
    $region16: #{tpu_custom_call.1} parent=1 // pred_region
      %37 = dma.done [#allocation6], 2048
    $region17: #{tpu_custom_call.1} parent=1 // pred_fallthru
      _
    %v38 = vld [vmem:[#allocation5] sm:$0xff]
    %v39 = vld [vmem:[#allocation5 + $0x8] sm:$0xff]
    %v40 = vld [vmem:[#allocation5 + $0x10] sm:$0xff]
    %v41 = vld [vmem:[#allocation5 + $0x18] sm:$0xff]
    %v42 = vld [vmem:[#allocation5 + $0x20] sm:$0xff]
    %v43 = vld [vmem:[#allocation5 + $0x28] sm:$0xff]
    %v44 = vld [vmem:[#allocation5 + $0x30] sm:$0xff]
    %v45 = vld [vmem:[#allocation5 + $0x38] sm:$0xff]
    %v46 = vld [vmem:[#allocation5 + $0x40] sm:$0xff]
    %v47 = vld [vmem:[#allocation5 + $0x48] sm:$0xff]
    %v48 = vld [vmem:[#allocation5 + $0x50] sm:$0xff]
    %v49 = vld [vmem:[#allocation5 + $0x58] sm:$0xff]
    %v50 = vld [vmem:[#allocation5 + $0x60] sm:$0xff]
    %v51 = vld [vmem:[#allocation5 + $0x68] sm:$0xff]
    %v52 = vld [vmem:[#allocation5 + $0x70] sm:$0xff]
    %v53 = vld [vmem:[#allocation5 + $0x78] sm:$0xff]
    %v54 = vld [vmem:[#allocation2] sm:$0xf]
    %55 = vmatprep.subr.mxu0 0.0
    %v56 = vand.u32 %v38, 4294901760
    %57 = vmatpush1.msra.mxu0 %v56
    %58 = vmatprep.subr.mxu0 0.0
    %v59 = vand.u32 %v39, 4294901760
    %60 = vmatpush1.msra.mxu0 %v59
    %61 = vmatprep.subr.mxu0 0.0
    %v62 = vand.u32 %v40, 4294901760
    %63 = vmatpush1.msra.mxu0 %v62
    %64 = vmatprep.subr.mxu0 0.0
    %v65 = vand.u32 %v41, 4294901760
    %66 = vmatpush1.msra.mxu0 %v65
    %67 = vmatprep.subr.mxu0 0.0
    %v68 = vand.u32 %v42, 4294901760
    %69 = vmatpush1.msra.mxu0 %v68
    %70 = vmatprep.subr.mxu0 0.0
    %v71 = vand.u32 %v43, 4294901760
    %72 = vmatpush1.msra.mxu0 %v71
    %73 = vmatprep.subr.mxu0 0.0
    %v74 = vand.u32 %v44, 4294901760
    %75 = vmatpush1.msra.mxu0 %v74
    %76 = vmatprep.subr.mxu0 0.0
    %v77 = vand.u32 %v45, 4294901760
    %78 = vmatpush1.msra.mxu0 %v77
    %79 = vmatprep.subr.mxu0 0.0
    %v80 = vand.u32 %v46, 4294901760
    %81 = vmatpush1.msra.mxu0 %v80
    %82 = vmatprep.subr.mxu0 0.0
    %v83 = vand.u32 %v47, 4294901760
    %84 = vmatpush1.msra.mxu0 %v83
    %85 = vmatprep.subr.mxu0 0.0
    %v86 = vand.u32 %v48, 4294901760
    %87 = vmatpush1.msra.mxu0 %v86
    %88 = vmatprep.subr.mxu0 0.0
    %v89 = vand.u32 %v49, 4294901760
    %90 = vmatpush1.msra.mxu0 %v89
    %91 = vmatprep.subr.mxu0 0.0
    %v92 = vand.u32 %v50, 4294901760
    %93 = vmatpush1.msra.mxu0 %v92
    %94 = vmatprep.subr.mxu0 0.0
    %v95 = vand.u32 %v51, 4294901760
    %96 = vmatpush1.msra.mxu0 %v95
    %97 = vmatprep.subr.mxu0 0.0
    %v98 = vand.u32 %v52, 4294901760
    %99 = vmatpush1.msra.mxu0 %v98
    %100 = vmatprep.subr.mxu0 0.0
    %v101 = vand.u32 %v53, 4294901760
    %102 = vmatpush1.msra.mxu0 %v101
    %103 = vmatprep.subr.mxu0 0.0
    %104 = vmatpush1.msra.mxu0 0.0
    %105 = vmatprep.subr.mxu0 0.0
    %106 = vmatpush1.msra.mxu0 0.0
    %107 = vmatprep.subr.mxu0 0.0
    %108 = vmatpush1.msra.mxu0 0.0
    %109 = vmatprep.subr.mxu0 0.0
    %110 = vmatpush1.msra.mxu0 0.0
    %111 = vmatprep.subr.mxu0 0.0
    %112 = vmatpush1.msra.mxu0 0.0
    %113 = vmatprep.subr.mxu0 0.0
    %114 = vmatpush1.msra.mxu0 0.0
    %115 = vmatprep.subr.mxu0 0.0
    %116 = vmatpush1.msra.mxu0 0.0
    %117 = vmatprep.subr.mxu0 0.0
    %118 = vmatpush1.msra.mxu0 0.0
    %119 = vmatprep.subr.mxu0 0.0
    %120 = vmatpush1.msra.mxu0 0.0
    %121 = vmatprep.subr.mxu0 0.0
    %122 = vmatpush1.msra.mxu0 0.0
    %123 = vmatprep.subr.mxu0 0.0
    %124 = vmatpush1.msra.mxu0 0.0
    %125 = vmatprep.subr.mxu0 0.0
    %126 = vmatpush1.msra.mxu0 0.0
    %127 = vmatprep.subr.mxu0 0.0
    %128 = vmatpush1.msra.mxu0 0.0
    %129 = vmatprep.subr.mxu0 0.0
    %130 = vmatpush1.msra.mxu0 0.0
    %131 = vmatprep.subr.mxu0 0.0
    %132 = vmatpush1.msra.mxu0 0.0
    %133 = vmatprep.subr.mxu0 0.0
    %134 = vmatpush1.msra.mxu0 0.0
    %135 = vmatprep.mubr.f32.mxu0 0.0
    %v136 = vand.u32 %v54, 4294901760
    %v137 = vsub.f32 %v54, %v136
    %v138 = vand.u32 %v137, 4294901760
    %v139 = vsub.f32 %v137, %v138
    %v140 = vand.u32 %v139, 4294901760
    %141 = vmatmul.mubr.f32.gmra.mrb[0].mxu0 %v140
    %v142 = vpop.f32.mrb[0].mxu0
    %v143 = vadd.f32 128.0, %v142
    %v144 = vpop.f32.mrb[0].mxu0
    %145 = vdwg.mxu0
    %146 = vmatprep.subr.mxu0 0.0
    %v147 = vand.u32 %v38, 4294901760
    %v148 = vsub.f32 %v38, %v147
    %v149 = vand.u32 %v148, 4294901760
    %v150 = vsub.f32 %v148, %v149
    %v151 = vand.u32 %v150, 4294901760
    %152 = vmatpush1.msra.mxu0 %v151
    %153 = vmatprep.subr.mxu0 0.0
    %v154 = vand.u32 %v39, 4294901760
    %v155 = vsub.f32 %v39, %v154
    %v156 = vand.u32 %v155, 4294901760
    %v157 = vsub.f32 %v155, %v156
    %v158 = vand.u32 %v157, 4294901760
    %159 = vmatpush1.msra.mxu0 %v158
    %160 = vmatprep.subr.mxu0 0.0
    %v161 = vand.u32 %v40, 4294901760
    %v162 = vsub.f32 %v40, %v161
    %v163 = vand.u32 %v162, 4294901760
    %v164 = vsub.f32 %v162, %v163
    %v165 = vand.u32 %v164, 4294901760
    %166 = vmatpush1.msra.mxu0 %v165
    %167 = vmatprep.subr.mxu0 0.0
    %v168 = vand.u32 %v41, 4294901760
    %v169 = vsub.f32 %v41, %v168
    %v170 = vand.u32 %v169, 4294901760
    %v171 = vsub.f32 %v169, %v170
    %v172 = vand.u32 %v171, 4294901760
    %173 = vmatpush1.msra.mxu0 %v172
    %174 = vmatprep.subr.mxu0 0.0
    %v175 = vand.u32 %v42, 4294901760
    %v176 = vsub.f32 %v42, %v175
    %v177 = vand.u32 %v176, 4294901760
    %v178 = vsub.f32 %v176, %v177
    %v179 = vand.u32 %v178, 4294901760
    %180 = vmatpush1.msra.mxu0 %v179
    %181 = vmatprep.subr.mxu0 0.0
    %v182 = vand.u32 %v43, 4294901760
    %v183 = vsub.f32 %v43, %v182
    %v184 = vand.u32 %v183, 4294901760
    %v185 = vsub.f32 %v183, %v184
    %v186 = vand.u32 %v185, 4294901760
    %187 = vmatpush1.msra.mxu0 %v186
    %188 = vmatprep.subr.mxu0 0.0
    %v189 = vand.u32 %v44, 4294901760
    %v190 = vsub.f32 %v44, %v189
    %v191 = vand.u32 %v190, 4294901760
    %v192 = vsub.f32 %v190, %v191
    %v193 = vand.u32 %v192, 4294901760
    %194 = vmatpush1.msra.mxu0 %v193
    %195 = vmatprep.subr.mxu0 0.0
    %v196 = vand.u32 %v45, 4294901760
    %v197 = vsub.f32 %v45, %v196
    %v198 = vand.u32 %v197, 4294901760
    %v199 = vsub.f32 %v197, %v198
    %v200 = vand.u32 %v199, 4294901760
    %201 = vmatpush1.msra.mxu0 %v200
    %202 = vmatprep.subr.mxu0 0.0
    %v203 = vand.u32 %v46, 4294901760
    %v204 = vsub.f32 %v46, %v203
    %v205 = vand.u32 %v204, 4294901760
    %v206 = vsub.f32 %v204, %v205
    %v207 = vand.u32 %v206, 4294901760
    %208 = vmatpush1.msra.mxu0 %v207
    %209 = vmatprep.subr.mxu0 0.0
    %v210 = vand.u32 %v47, 4294901760
    %v211 = vsub.f32 %v47, %v210
    %v212 = vand.u32 %v211, 4294901760
    %v213 = vsub.f32 %v211, %v212
    %v214 = vand.u32 %v213, 4294901760
    %215 = vmatpush1.msra.mxu0 %v214
    %216 = vmatprep.subr.mxu0 0.0
    %v217 = vand.u32 %v48, 4294901760
    %v218 = vsub.f32 %v48, %v217
    %v219 = vand.u32 %v218, 4294901760
    %v220 = vsub.f32 %v218, %v219
    %v221 = vand.u32 %v220, 4294901760
    %222 = vmatpush1.msra.mxu0 %v221
    %223 = vmatprep.subr.mxu0 0.0
    %v224 = vand.u32 %v49, 4294901760
    %v225 = vsub.f32 %v49, %v224
    %v226 = vand.u32 %v225, 4294901760
    %v227 = vsub.f32 %v225, %v226
    %v228 = vand.u32 %v227, 4294901760
    %229 = vmatpush1.msra.mxu0 %v228
    %230 = vmatprep.subr.mxu0 0.0
    %v231 = vand.u32 %v50, 4294901760
    %v232 = vsub.f32 %v50, %v231
    %v233 = vand.u32 %v232, 4294901760
    %v234 = vsub.f32 %v232, %v233
    %v235 = vand.u32 %v234, 4294901760
    %236 = vmatpush1.msra.mxu0 %v235
    %237 = vmatprep.subr.mxu0 0.0
    %v238 = vand.u32 %v51, 4294901760
    %v239 = vsub.f32 %v51, %v238
    %v240 = vand.u32 %v239, 4294901760
    %v241 = vsub.f32 %v239, %v240
    %v242 = vand.u32 %v241, 4294901760
    %243 = vmatpush1.msra.mxu0 %v242
    %244 = vmatprep.subr.mxu0 0.0
    %v245 = vand.u32 %v52, 4294901760
    %v246 = vsub.f32 %v52, %v245
    %v247 = vand.u32 %v246, 4294901760
    %v248 = vsub.f32 %v246, %v247
    %v249 = vand.u32 %v248, 4294901760
    %250 = vmatpush1.msra.mxu0 %v249
    %251 = vmatprep.subr.mxu0 0.0
    %v252 = vand.u32 %v53, 4294901760
    %v253 = vsub.f32 %v53, %v252
    %v254 = vand.u32 %v253, 4294901760
    %v255 = vsub.f32 %v253, %v254
    %v256 = vand.u32 %v255, 4294901760
    %257 = vmatpush1.msra.mxu0 %v256
    %258 = vmatprep.subr.mxu0 0.0
    %259 = vmatpush1.msra.mxu0 0.0
    %260 = vmatprep.subr.mxu0 0.0
    %261 = vmatpush1.msra.mxu0 0.0
    %262 = vmatprep.subr.mxu0 0.0
    %263 = vmatpush1.msra.mxu0 0.0
    %264 = vmatprep.subr.mxu0 0.0
    %265 = vmatpush1.msra.mxu0 0.0
    %266 = vmatprep.subr.mxu0 0.0
    %267 = vmatpush1.msra.mxu0 0.0
    %268 = vmatprep.subr.mxu0 0.0
    %269 = vmatpush1.msra.mxu0 0.0
    %270 = vmatprep.subr.mxu0 0.0
    %271 = vmatpush1.msra.mxu0 0.0
    %272 = vmatprep.subr.mxu0 0.0
    %273 = vmatpush1.msra.mxu0 0.0
    %274 = vmatprep.subr.mxu0 0.0
    %275 = vmatpush1.msra.mxu0 0.0
    %276 = vmatprep.subr.mxu0 0.0
    %277 = vmatpush1.msra.mxu0 0.0
    %278 = vmatprep.subr.mxu0 0.0
    %279 = vmatpush1.msra.mxu0 0.0
    %280 = vmatprep.subr.mxu0 0.0
    %281 = vmatpush1.msra.mxu0 0.0
    %282 = vmatprep.subr.mxu0 0.0
    %283 = vmatpush1.msra.mxu0 0.0
    %284 = vmatprep.subr.mxu0 0.0
    %285 = vmatpush1.msra.mxu0 0.0
    %286 = vmatprep.subr.mxu0 0.0
    %287 = vmatpush1.msra.mxu0 0.0
    %288 = vmatprep.subr.mxu0 0.0
    %289 = vmatpush1.msra.mxu0 0.0
    %290 = vmatprep.mubr.f32.mxu0 0.0
    %v291 = vand.u32 %v54, 4294901760
    %292 = vmatmul.mubr.f32.gmra.mrb[0].mxu0 %v291
    %v293 = vpop.f32.mrb[0].mxu0
    %v294 = vadd.f32 %v143, %v293
    %v295 = vpop.f32.mrb[0].mxu0
    %296 = vdwg.mxu0
    %297 = vmatprep.subr.mxu0 0.0
    %v298 = vand.u32 %v38, 4294901760
    %v299 = vsub.f32 %v38, %v298
    %300 = vmatpush1.msra.mxu0 %v299
    %301 = vmatprep.subr.mxu0 0.0
    %v302 = vand.u32 %v39, 4294901760
    %v303 = vsub.f32 %v39, %v302
    %304 = vmatpush1.msra.mxu0 %v303
    %305 = vmatprep.subr.mxu0 0.0
    %v306 = vand.u32 %v40, 4294901760
    %v307 = vsub.f32 %v40, %v306
    %308 = vmatpush1.msra.mxu0 %v307
    %309 = vmatprep.subr.mxu0 0.0
    %v310 = vand.u32 %v41, 4294901760
    %v311 = vsub.f32 %v41, %v310
    %312 = vmatpush1.msra.mxu0 %v311
    %313 = vmatprep.subr.mxu0 0.0
    %v314 = vand.u32 %v42, 4294901760
    %v315 = vsub.f32 %v42, %v314
    %316 = vmatpush1.msra.mxu0 %v315
    %317 = vmatprep.subr.mxu0 0.0
    %v318 = vand.u32 %v43, 4294901760
    %v319 = vsub.f32 %v43, %v318
    %320 = vmatpush1.msra.mxu0 %v319
    %321 = vmatprep.subr.mxu0 0.0
    %v322 = vand.u32 %v44, 4294901760
    %v323 = vsub.f32 %v44, %v322
    %324 = vmatpush1.msra.mxu0 %v323
    %325 = vmatprep.subr.mxu0 0.0
    %v326 = vand.u32 %v45, 4294901760
    %v327 = vsub.f32 %v45, %v326
    %328 = vmatpush1.msra.mxu0 %v327
    %329 = vmatprep.subr.mxu0 0.0
    %v330 = vand.u32 %v46, 4294901760
    %v331 = vsub.f32 %v46, %v330
    %332 = vmatpush1.msra.mxu0 %v331
    %333 = vmatprep.subr.mxu0 0.0
    %v334 = vand.u32 %v47, 4294901760
    %v335 = vsub.f32 %v47, %v334
    %336 = vmatpush1.msra.mxu0 %v335
    %337 = vmatprep.subr.mxu0 0.0
    %v338 = vand.u32 %v48, 4294901760
    %v339 = vsub.f32 %v48, %v338
    %340 = vmatpush1.msra.mxu0 %v339
    %341 = vmatprep.subr.mxu0 0.0
    %v342 = vand.u32 %v49, 4294901760
    %v343 = vsub.f32 %v49, %v342
    %344 = vmatpush1.msra.mxu0 %v343
    %345 = vmatprep.subr.mxu0 0.0
    %v346 = vand.u32 %v50, 4294901760
    %v347 = vsub.f32 %v50, %v346
    %348 = vmatpush1.msra.mxu0 %v347
    %349 = vmatprep.subr.mxu0 0.0
    %v350 = vand.u32 %v51, 4294901760
    %v351 = vsub.f32 %v51, %v350
    %352 = vmatpush1.msra.mxu0 %v351
    %353 = vmatprep.subr.mxu0 0.0
    %v354 = vand.u32 %v52, 4294901760
    %v355 = vsub.f32 %v52, %v354
    %356 = vmatpush1.msra.mxu0 %v355
    %357 = vmatprep.subr.mxu0 0.0
    %v358 = vand.u32 %v53, 4294901760
    %v359 = vsub.f32 %v53, %v358
    %360 = vmatpush1.msra.mxu0 %v359
    %361 = vmatprep.subr.mxu0 0.0
    %362 = vmatpush1.msra.mxu0 0.0
    %363 = vmatprep.subr.mxu0 0.0
    %364 = vmatpush1.msra.mxu0 0.0
    %365 = vmatprep.subr.mxu0 0.0
    %366 = vmatpush1.msra.mxu0 0.0
    %367 = vmatprep.subr.mxu0 0.0
    %368 = vmatpush1.msra.mxu0 0.0
    %369 = vmatprep.subr.mxu0 0.0
    %370 = vmatpush1.msra.mxu0 0.0
    %371 = vmatprep.subr.mxu0 0.0
    %372 = vmatpush1.msra.mxu0 0.0
    %373 = vmatprep.subr.mxu0 0.0
    %374 = vmatpush1.msra.mxu0 0.0
    %375 = vmatprep.subr.mxu0 0.0
    %376 = vmatpush1.msra.mxu0 0.0
    %377 = vmatprep.subr.mxu0 0.0
    %378 = vmatpush1.msra.mxu0 0.0
    %379 = vmatprep.subr.mxu0 0.0
    %380 = vmatpush1.msra.mxu0 0.0
    %381 = vmatprep.subr.mxu0 0.0
    %382 = vmatpush1.msra.mxu0 0.0
    %383 = vmatprep.subr.mxu0 0.0
    %384 = vmatpush1.msra.mxu0 0.0
    %385 = vmatprep.subr.mxu0 0.0
    %386 = vmatpush1.msra.mxu0 0.0
    %387 = vmatprep.subr.mxu0 0.0
    %388 = vmatpush1.msra.mxu0 0.0
    %389 = vmatprep.subr.mxu0 0.0
    %390 = vmatpush1.msra.mxu0 0.0
    %391 = vmatprep.subr.mxu0 0.0
    %392 = vmatpush1.msra.mxu0 0.0
    %393 = vmatprep.mubr.f32.mxu0 0.0
    %v394 = vand.u32 %v54, 4294901760
    %v395 = vsub.f32 %v54, %v394
    %396 = vmatmul.mubr.f32.gmra.mrb[0].mxu0 %v395
    %v397 = vpop.f32.mrb[0].mxu0
    %v398 = vadd.f32 %v294, %v397
    %v399 = vpop.f32.mrb[0].mxu0
    %400 = vdwg.mxu0
    %401 = vmatprep.subr.mxu0 0.0
    %v402 = vand.u32 %v38, 4294901760
    %403 = vmatpush1.msra.mxu0 %v402
    %404 = vmatprep.subr.mxu0 0.0
    %v405 = vand.u32 %v39, 4294901760
    %406 = vmatpush1.msra.mxu0 %v405
    %407 = vmatprep.subr.mxu0 0.0
    %v408 = vand.u32 %v40, 4294901760
    %409 = vmatpush1.msra.mxu0 %v408
    %410 = vmatprep.subr.mxu0 0.0
    %v411 = vand.u32 %v41, 4294901760
    %412 = vmatpush1.msra.mxu0 %v411
    %413 = vmatprep.subr.mxu0 0.0
    %v414 = vand.u32 %v42, 4294901760
    %415 = vmatpush1.msra.mxu0 %v414
    %416 = vmatprep.subr.mxu0 0.0
    %v417 = vand.u32 %v43, 4294901760
    %418 = vmatpush1.msra.mxu0 %v417
    %419 = vmatprep.subr.mxu0 0.0
    %v420 = vand.u32 %v44, 4294901760
    %421 = vmatpush1.msra.mxu0 %v420
    %422 = vmatprep.subr.mxu0 0.0
    %v423 = vand.u32 %v45, 4294901760
    %424 = vmatpush1.msra.mxu0 %v423
    %425 = vmatprep.subr.mxu0 0.0
    %v426 = vand.u32 %v46, 4294901760
    %427 = vmatpush1.msra.mxu0 %v426
    %428 = vmatprep.subr.mxu0 0.0
    %v429 = vand.u32 %v47, 4294901760
    %430 = vmatpush1.msra.mxu0 %v429
    %431 = vmatprep.subr.mxu0 0.0
    %v432 = vand.u32 %v48, 4294901760
    %433 = vmatpush1.msra.mxu0 %v432
    %434 = vmatprep.subr.mxu0 0.0
    %v435 = vand.u32 %v49, 4294901760
    %436 = vmatpush1.msra.mxu0 %v435
    %437 = vmatprep.subr.mxu0 0.0
    %v438 = vand.u32 %v50, 4294901760
    %439 = vmatpush1.msra.mxu0 %v438
    %440 = vmatprep.subr.mxu0 0.0
    %v441 = vand.u32 %v51, 4294901760
    %442 = vmatpush1.msra.mxu0 %v441
    %443 = vmatprep.subr.mxu0 0.0
    %v444 = vand.u32 %v52, 4294901760
    %445 = vmatpush1.msra.mxu0 %v444
    %446 = vmatprep.subr.mxu0 0.0
    %v447 = vand.u32 %v53, 4294901760
    %448 = vmatpush1.msra.mxu0 %v447
    %449 = vmatprep.subr.mxu0 0.0
    %450 = vmatpush1.msra.mxu0 0.0
    %451 = vmatprep.subr.mxu0 0.0
    %452 = vmatpush1.msra.mxu0 0.0
    %453 = vmatprep.subr.mxu0 0.0
    %454 = vmatpush1.msra.mxu0 0.0
    %455 = vmatprep.subr.mxu0 0.0
    %456 = vmatpush1.msra.mxu0 0.0
    %457 = vmatprep.subr.mxu0 0.0
    %458 = vmatpush1.msra.mxu0 0.0
    %459 = vmatprep.subr.mxu0 0.0
    %460 = vmatpush1.msra.mxu0 0.0
    %461 = vmatprep.subr.mxu0 0.0
    %462 = vmatpush1.msra.mxu0 0.0
    %463 = vmatprep.subr.mxu0 0.0
    %464 = vmatpush1.msra.mxu0 0.0
    %465 = vmatprep.subr.mxu0 0.0
    %466 = vmatpush1.msra.mxu0 0.0
    %467 = vmatprep.subr.mxu0 0.0
    %468 = vmatpush1.msra.mxu0 0.0
    %469 = vmatprep.subr.mxu0 0.0
    %470 = vmatpush1.msra.mxu0 0.0
    %471 = vmatprep.subr.mxu0 0.0
    %472 = vmatpush1.msra.mxu0 0.0
    %473 = vmatprep.subr.mxu0 0.0
    %474 = vmatpush1.msra.mxu0 0.0
    %475 = vmatprep.subr.mxu0 0.0
    %476 = vmatpush1.msra.mxu0 0.0
    %477 = vmatprep.subr.mxu0 0.0
    %478 = vmatpush1.msra.mxu0 0.0
    %479 = vmatprep.subr.mxu0 0.0
    %480 = vmatpush1.msra.mxu0 0.0
    %481 = vmatprep.mubr.f32.mxu0 0.0
    %v482 = vand.u32 %v54, 4294901760
    %v483 = vsub.f32 %v54, %v482
    %v484 = vand.u32 %v483, 4294901760
    %485 = vmatmul.mubr.f32.gmra.mrb[0].mxu0 %v484
    %v486 = vpop.f32.mrb[0].mxu0
    %v487 = vadd.f32 %v398, %v486
    %v488 = vpop.f32.mrb[0].mxu0
    %489 = vdwg.mxu0
    %490 = vmatprep.subr.mxu0 0.0
    %v491 = vand.u32 %v38, 4294901760
    %v492 = vsub.f32 %v38, %v491
    %v493 = vand.u32 %v492, 4294901760
    %494 = vmatpush1.msra.mxu0 %v493
    %495 = vmatprep.subr.mxu0 0.0
    %v496 = vand.u32 %v39, 4294901760
    %v497 = vsub.f32 %v39, %v496
    %v498 = vand.u32 %v497, 4294901760
    %499 = vmatpush1.msra.mxu0 %v498
    %500 = vmatprep.subr.mxu0 0.0
    %v501 = vand.u32 %v40, 4294901760
    %v502 = vsub.f32 %v40, %v501
    %v503 = vand.u32 %v502, 4294901760
    %504 = vmatpush1.msra.mxu0 %v503
    %505 = vmatprep.subr.mxu0 0.0
    %v506 = vand.u32 %v41, 4294901760
    %v507 = vsub.f32 %v41, %v506
    %v508 = vand.u32 %v507, 4294901760
    %509 = vmatpush1.msra.mxu0 %v508
    %510 = vmatprep.subr.mxu0 0.0
    %v511 = vand.u32 %v42, 4294901760
    %v512 = vsub.f32 %v42, %v511
    %v513 = vand.u32 %v512, 4294901760
    %514 = vmatpush1.msra.mxu0 %v513
    %515 = vmatprep.subr.mxu0 0.0
    %v516 = vand.u32 %v43, 4294901760
    %v517 = vsub.f32 %v43, %v516
    %v518 = vand.u32 %v517, 4294901760
    %519 = vmatpush1.msra.mxu0 %v518
    %520 = vmatprep.subr.mxu0 0.0
    %v521 = vand.u32 %v44, 4294901760
    %v522 = vsub.f32 %v44, %v521
    %v523 = vand.u32 %v522, 4294901760
    %524 = vmatpush1.msra.mxu0 %v523
    %525 = vmatprep.subr.mxu0 0.0
    %v526 = vand.u32 %v45, 4294901760
    %v527 = vsub.f32 %v45, %v526
    %v528 = vand.u32 %v527, 4294901760
    %529 = vmatpush1.msra.mxu0 %v528
    %530 = vmatprep.subr.mxu0 0.0
    %v531 = vand.u32 %v46, 4294901760
    %v532 = vsub.f32 %v46, %v531
    %v533 = vand.u32 %v532, 4294901760
    %534 = vmatpush1.msra.mxu0 %v533
    %535 = vmatprep.subr.mxu0 0.0
    %v536 = vand.u32 %v47, 4294901760
    %v537 = vsub.f32 %v47, %v536
    %v538 = vand.u32 %v537, 4294901760
    %539 = vmatpush1.msra.mxu0 %v538
    %540 = vmatprep.subr.mxu0 0.0
    %v541 = vand.u32 %v48, 4294901760
    %v542 = vsub.f32 %v48, %v541
    %v543 = vand.u32 %v542, 4294901760
    %544 = vmatpush1.msra.mxu0 %v543
    %545 = vmatprep.subr.mxu0 0.0
    %v546 = vand.u32 %v49, 4294901760
    %v547 = vsub.f32 %v49, %v546
    %v548 = vand.u32 %v547, 4294901760
    %549 = vmatpush1.msra.mxu0 %v548
    %550 = vmatprep.subr.mxu0 0.0
    %v551 = vand.u32 %v50, 4294901760
    %v552 = vsub.f32 %v50, %v551
    %v553 = vand.u32 %v552, 4294901760
    %554 = vmatpush1.msra.mxu0 %v553
    %555 = vmatprep.subr.mxu0 0.0
    %v556 = vand.u32 %v51, 4294901760
    %v557 = vsub.f32 %v51, %v556
    %v558 = vand.u32 %v557, 4294901760
    %559 = vmatpush1.msra.mxu0 %v558
    %560 = vmatprep.subr.mxu0 0.0
    %v561 = vand.u32 %v52, 4294901760
    %v562 = vsub.f32 %v52, %v561
    %v563 = vand.u32 %v562, 4294901760
    %564 = vmatpush1.msra.mxu0 %v563
    %565 = vmatprep.subr.mxu0 0.0
    %v566 = vand.u32 %v53, 4294901760
    %v567 = vsub.f32 %v53, %v566
    %v568 = vand.u32 %v567, 4294901760
    %569 = vmatpush1.msra.mxu0 %v568
    %570 = vmatprep.subr.mxu0 0.0
    %571 = vmatpush1.msra.mxu0 0.0
    %572 = vmatprep.subr.mxu0 0.0
    %573 = vmatpush1.msra.mxu0 0.0
    %574 = vmatprep.subr.mxu0 0.0
    %575 = vmatpush1.msra.mxu0 0.0
    %576 = vmatprep.subr.mxu0 0.0
    %577 = vmatpush1.msra.mxu0 0.0
    %578 = vmatprep.subr.mxu0 0.0
    %579 = vmatpush1.msra.mxu0 0.0
    %580 = vmatprep.subr.mxu0 0.0
    %581 = vmatpush1.msra.mxu0 0.0
    %582 = vmatprep.subr.mxu0 0.0
    %583 = vmatpush1.msra.mxu0 0.0
    %584 = vmatprep.subr.mxu0 0.0
    %585 = vmatpush1.msra.mxu0 0.0
    %586 = vmatprep.subr.mxu0 0.0
    %587 = vmatpush1.msra.mxu0 0.0
    %588 = vmatprep.subr.mxu0 0.0
    %589 = vmatpush1.msra.mxu0 0.0
    %590 = vmatprep.subr.mxu0 0.0
    %591 = vmatpush1.msra.mxu0 0.0
    %592 = vmatprep.subr.mxu0 0.0
    %593 = vmatpush1.msra.mxu0 0.0
    %594 = vmatprep.subr.mxu0 0.0
    %595 = vmatpush1.msra.mxu0 0.0
    %596 = vmatprep.subr.mxu0 0.0
    %597 = vmatpush1.msra.mxu0 0.0
    %598 = vmatprep.subr.mxu0 0.0
    %599 = vmatpush1.msra.mxu0 0.0
    %600 = vmatprep.subr.mxu0 0.0
    %601 = vmatpush1.msra.mxu0 0.0
    %602 = vmatprep.mubr.f32.mxu0 0.0
    %v603 = vand.u32 %v54, 4294901760
    %604 = vmatmul.mubr.f32.gmra.mrb[0].mxu0 %v603
    %v605 = vpop.f32.mrb[0].mxu0
    %v606 = vadd.f32 %v487, %v605
    %v607 = vpop.f32.mrb[0].mxu0
    %608 = vdwg.mxu0
    %609 = vmatprep.subr.mxu0 0.0
    %v610 = vand.u32 %v38, 4294901760
    %611 = vmatpush1.msra.mxu0 %v610
    %612 = vmatprep.subr.mxu0 0.0
    %v613 = vand.u32 %v39, 4294901760
    %614 = vmatpush1.msra.mxu0 %v613
    %615 = vmatprep.subr.mxu0 0.0
    %v616 = vand.u32 %v40, 4294901760
    %617 = vmatpush1.msra.mxu0 %v616
    %618 = vmatprep.subr.mxu0 0.0
    %v619 = vand.u32 %v41, 4294901760
    %620 = vmatpush1.msra.mxu0 %v619
    %621 = vmatprep.subr.mxu0 0.0
    %v622 = vand.u32 %v42, 4294901760
    %623 = vmatpush1.msra.mxu0 %v622
    %624 = vmatprep.subr.mxu0 0.0
    %v625 = vand.u32 %v43, 4294901760
    %626 = vmatpush1.msra.mxu0 %v625
    %627 = vmatprep.subr.mxu0 0.0
    %v628 = vand.u32 %v44, 4294901760
    %629 = vmatpush1.msra.mxu0 %v628
    %630 = vmatprep.subr.mxu0 0.0
    %v631 = vand.u32 %v45, 4294901760
    %632 = vmatpush1.msra.mxu0 %v631
    %633 = vmatprep.subr.mxu0 0.0
    %v634 = vand.u32 %v46, 4294901760
    %635 = vmatpush1.msra.mxu0 %v634
    %636 = vmatprep.subr.mxu0 0.0
    %v637 = vand.u32 %v47, 4294901760
    %638 = vmatpush1.msra.mxu0 %v637
    %639 = vmatprep.subr.mxu0 0.0
    %v640 = vand.u32 %v48, 4294901760
    %641 = vmatpush1.msra.mxu0 %v640
    %642 = vmatprep.subr.mxu0 0.0
    %v643 = vand.u32 %v49, 4294901760
    %644 = vmatpush1.msra.mxu0 %v643
    %645 = vmatprep.subr.mxu0 0.0
    %v646 = vand.u32 %v50, 4294901760
    %647 = vmatpush1.msra.mxu0 %v646
    %648 = vmatprep.subr.mxu0 0.0
    %v649 = vand.u32 %v51, 4294901760
    %650 = vmatpush1.msra.mxu0 %v649
    %651 = vmatprep.subr.mxu0 0.0
    %v652 = vand.u32 %v52, 4294901760
    %653 = vmatpush1.msra.mxu0 %v652
    %654 = vmatprep.subr.mxu0 0.0
    %v655 = vand.u32 %v53, 4294901760
    %656 = vmatpush1.msra.mxu0 %v655
    %657 = vmatprep.subr.mxu0 0.0
    %658 = vmatpush1.msra.mxu0 0.0
    %659 = vmatprep.subr.mxu0 0.0
    %660 = vmatpush1.msra.mxu0 0.0
    %661 = vmatprep.subr.mxu0 0.0
    %662 = vmatpush1.msra.mxu0 0.0
    %663 = vmatprep.subr.mxu0 0.0
    %664 = vmatpush1.msra.mxu0 0.0
    %665 = vmatprep.subr.mxu0 0.0
    %666 = vmatpush1.msra.mxu0 0.0
    %667 = vmatprep.subr.mxu0 0.0
    %668 = vmatpush1.msra.mxu0 0.0
    %669 = vmatprep.subr.mxu0 0.0
    %670 = vmatpush1.msra.mxu0 0.0
    %671 = vmatprep.subr.mxu0 0.0
    %672 = vmatpush1.msra.mxu0 0.0
    %673 = vmatprep.subr.mxu0 0.0
    %674 = vmatpush1.msra.mxu0 0.0
    %675 = vmatprep.subr.mxu0 0.0
    %676 = vmatpush1.msra.mxu0 0.0
    %677 = vmatprep.subr.mxu0 0.0
    %678 = vmatpush1.msra.mxu0 0.0
    %679 = vmatprep.subr.mxu0 0.0
    %680 = vmatpush1.msra.mxu0 0.0
    %681 = vmatprep.subr.mxu0 0.0
    %682 = vmatpush1.msra.mxu0 0.0
    %683 = vmatprep.subr.mxu0 0.0
    %684 = vmatpush1.msra.mxu0 0.0
    %685 = vmatprep.subr.mxu0 0.0
    %686 = vmatpush1.msra.mxu0 0.0
    %687 = vmatprep.subr.mxu0 0.0
    %688 = vmatpush1.msra.mxu0 0.0
    %689 = vmatprep.mubr.f32.mxu0 0.0
    %v690 = vand.u32 %v54, 4294901760
    %691 = vmatmul.mubr.f32.gmra.mrb[0].mxu0 %v690
    %v692 = vpop.f32.mrb[0].mxu0
    %v693 = vadd.f32 %v606, %v692
    %v694 = vpop.f32.mrb[0].mxu0
    %695 = vdwg.mxu0
    %696 = vst [vmem:[#allocation7] sm:$0xf] %v693
    // Predicated region
    $region18: #{tpu_custom_call.1} parent=1 // pred_check
      _
    $region19: #{tpu_custom_call.1} parent=1 // pred_check_branch
      %698 = sbr.rel (0) target = $region21
    $region20: #{tpu_custom_call.1} parent=1 // pred_region
      %s700 = ssub.s32 64, 64
      %701 = vsyncadd [#allocation4], %s700
      %s703 = sshll.u32 [#allocation7], 4
      %s704 = int_to_ptr.vmem [resolvable:$true] %s703
      %706 = dma.vmem_to_hbm [thread:$0]  %s704, 64, %s2, [#allocation4]
    $region21: #{tpu_custom_call.1} parent=1 // pred_fallthru
      _
    // Predicated region
    $region22: #{tpu_custom_call.1} parent=1 // pred_check
      _
    $region23: #{tpu_custom_call.1} parent=1 // pred_check_branch
      %708 = sbr.rel (0) target = $region25
    $region24: #{tpu_custom_call.1} parent=1 // pred_region
      %709 = dma.done [#allocation4], 64
    $region25: #{tpu_custom_call.1} parent=1 // pred_fallthru
      _
    %710 = vsyncpa [#allocation3], 1
    %711 = vsyncpa [#allocation6], 1
    %712 = vsyncpa [#allocation4], 1

</llo_original>
